<compile_context>
chip_gen: v7x
topology: tpu7x:2x2x1
jax: 0.10.0
libtpu: 0.0.40
codegen_flags: <defaults>
</compile_context>

<pallas_src>
import functools
import math

import jax
import jax.numpy as jnp
from jax.experimental import pallas as pl
from jax.experimental.pallas import tpu as pltpu


def _round_up(x, m):
    return (x + m - 1) // m * m


def _cdiv(a, b):
    return (a + b - 1) // b


def _gene_emb_proj_attn_kernel(xT_ref, haT_ref, hbT_ref, w_ref, b_ref, q_ref,
                               zT_ref, attnT_ref, *, embed_dim, x_dim,
                               cache_head):
    """Fused gene-embedding projection + attention pooling (one batch tile).

    All tensor blocks are laid out (features, batch_tile): batch on lanes.

    xT_ref:    (Dx, BT) f32 VMEM   expression features (the "head"), transposed
    haT_ref:   (Da, BT) f32 VMEM   drug-a embedding, transposed
    hbT_ref:   (Db, BT) f32 VMEM   drug-b embedding, transposed
    w_ref:     (E,)     f32 SMEM   Linear(1, E) weight (flattened)
    b_ref:     (E,)     f32 SMEM   Linear(1, E) bias
    q_ref:     (E,)     f32 SMEM   attention query vector
    zT_ref:    (E, BT)  f32 VMEM   pooled output, transposed
    attnT_ref: (Dx, BT) f32 VMEM   normalized attention weights, transposed
    """
    xT = xT_ref[...]                                             # (Dx, BT)
    # logical concat [X | h_a | h_b] along the feature (sublane) axis
    xcat = jnp.concatenate([xT, haT_ref[...], hbT_ref[...]], axis=0)  # (N, BT)

    scale = 1.0 / math.sqrt(float(embed_dim))                    # (E**-0.25)**2

    # attention logits over the concatenated feature axis; E unrolled.
    lg = None
    ze_head = []
    for e in range(embed_dim):
        we = w_ref[e]                                            # scalar (SMEM)
        be = b_ref[e]
        qe = q_ref[e] * scale                                    # scalar, hoisted
        ze = jnp.maximum(xcat * we + be, 0.0)                    # ReLU(x*w+b)
        if cache_head:
            ze_head.append(ze[:x_dim, :])                        # reuse in pooling
        term = ze * qe
        lg = term if lg is None else lg + term                   # (N, BT)

    # numerically-stable softmax over the FULL concatenated axis; only the
    # head rows are normalized/kept (the tail only feeds the denominator).
    m = jnp.max(lg, axis=0, keepdims=True)                       # (1, BT) XLU
    ex = jnp.exp(lg - m)                                         # one EUP pass
    denom = jnp.sum(ex, axis=0, keepdims=True)                   # (1, BT) XLU
    inv = pl.reciprocal(denom)                                   # exact
    attn = ex[:x_dim, :] * inv                                   # (Dx, BT)
    attnT_ref[...] = attn                                        # full-lane store

    # pooled output: z[e, b] = sum_n attn[n, b] * ReLU(x[n, b]*w[e] + b[e])
    # each write is one full lane-dense row of the (E, BT) output block.
    for e in range(embed_dim):
        if cache_head:
            ze = ze_head[e]
        else:
            ze = jnp.maximum(xT * w_ref[e] + b_ref[e], 0.0)      # cheap recompute
        zT_ref[e:e + 1, :] = jnp.sum(attn * ze, axis=0, keepdims=True)


def _choose_batch_tile(batch, x_dim, da, db, embed_dim, *, cache_head,
                       vmem_budget_bytes=24 << 20, max_tile=4096):
    """Pick a batch tile (lane axis).

    Footprint is computed with sublane padding to 8 (features) — the lane axis
    is the batch tile itself (multiple of 128, so no lane padding waste) — for
    double-buffered input/output blocks plus in-kernel temporaries. Budget sits
    well under the explicit 48 MiB scoped VMEM limit on all of v5e/v6e/v7x.
    """
    ru8 = lambda n: _round_up(n, 8)
    n_total = x_dim + da + db
    in_rows = ru8(x_dim) + ru8(da) + ru8(db)                # pipelined inputs
    out_rows = ru8(x_dim) + ru8(embed_dim)                  # pipelined outputs
    cache_rows = embed_dim * ru8(x_dim) if cache_head else 0
    tmp_rows = 3 * ru8(n_total) + ru8(x_dim) + cache_rows   # xcat, lg, ex, attn
    bytes_per_col = 4 * (2 * in_rows + 2 * out_rows + tmp_rows)

    bt = vmem_budget_bytes // max(bytes_per_col, 1)
    bt = max(128, min(max_tile, (bt // 128) * 128))
    if batch <= bt:
        # single block: lane dim equals the full batch dim (no padding needed)
        return int(batch)
    # keep >= ~4 grid steps so the "parallel" axis can shard across TCs (v7x)
    bt = min(bt, max(128, _round_up(_cdiv(batch, 4), 128)))
    return int(bt)


def gene_emb_proj_attention(X, h_a, h_b, params, *, gene_embed_dim=4,
                            max_batch_tile=4096):
    """Wrapper: lane-dense (features, batch) layout, batch-tiled pallas_call."""
    X = jnp.asarray(X, jnp.float32)
    h_a = jnp.asarray(h_a, jnp.float32)
    h_b = jnp.asarray(h_b, jnp.float32)

    B, x_dim = X.shape
    da = h_a.shape[1]
    db = h_b.shape[1]
    n_total = x_dim + da + db

    w = params["gene_embed_w"].reshape(gene_embed_dim).astype(jnp.float32)
    bias = params["gene_embed_b"].astype(jnp.float32)
    q = params["queryv"].astype(jnp.float32)

    # cache head activations only when the head is small (avoids spills / VMEM
    # pressure for production-scale gene counts).
    cache_head = x_dim <= 512

    b_tile = _choose_batch_tile(B, x_dim, da, db, gene_embed_dim,
                                cache_head=cache_head, max_tile=max_batch_tile)
    grid = (_cdiv(B, b_tile),)     # ragged last block is fine: batch columns
                                   # are independent; tail writes are masked.

    # transpose to (features, batch): batch becomes the 128-wide lane axis.
    xT, haT, hbT = X.T, h_a.T, h_b.T

    kernel = functools.partial(_gene_emb_proj_attn_kernel,
                               embed_dim=gene_embed_dim, x_dim=x_dim,
                               cache_head=cache_head)

    pool_flops = x_dim * (2 * gene_embed_dim
                          + (0 if cache_head else 2 * gene_embed_dim))
    cost = pl.CostEstimate(
        flops=int(B) * (n_total * (3 * gene_embed_dim + 4) + pool_flops),
        transcendentals=int(B) * n_total,
        bytes_accessed=4 * int(B) * (n_total + x_dim + gene_embed_dim),
    )

    zT, attnT = pl.pallas_call(
        kernel,
        out_shape=(
            jax.ShapeDtypeStruct((gene_embed_dim, B), jnp.float32),
            jax.ShapeDtypeStruct((x_dim, B), jnp.float32),
        ),
        grid=grid,
        in_specs=[
            pl.BlockSpec((x_dim, b_tile), lambda i: (0, i)),            # X^T
            pl.BlockSpec((da, b_tile), lambda i: (0, i)),               # h_a^T
            pl.BlockSpec((db, b_tile), lambda i: (0, i)),               # h_b^T
            pl.BlockSpec(memory_space=pltpu.MemorySpace.SMEM),          # w
            pl.BlockSpec(memory_space=pltpu.MemorySpace.SMEM),          # bias
            pl.BlockSpec(memory_space=pltpu.MemorySpace.SMEM),          # queryv
        ],
        out_specs=(
            pl.BlockSpec((gene_embed_dim, b_tile), lambda i: (0, i)),   # z^T
            pl.BlockSpec((x_dim, b_tile), lambda i: (0, i)),            # attn^T
        ),
        compiler_params=pltpu.CompilerParams(
            dimension_semantics=("parallel",),
            vmem_limit_bytes=48 << 20),
        cost_estimate=cost,
    )(xT, haT, hbT, w, bias, q)

    # transpose back to the module's (batch, ...) convention.
    return zT.T, attnT.T


def _reference(X, h_a, h_b, params, *, gene_embed_dim=4):
    """Pure-JAX reference matching the PyTorch forward exactly."""
    expression_dim = X.shape[1]
    Xhab = jnp.concatenate([X, h_a, h_b], axis=1)                    # (B, N)
    Xcol = Xhab[:, :, None]                                          # (B, N, 1)
    W = params["gene_embed_w"]                                       # (E, 1)
    bias = params["gene_embed_b"]                                    # (E,)
    q = params["queryv"]                                             # (E,)
    z_emb = jax.nn.relu(Xcol @ W.T + bias)                           # (B, N, E)
    scale = float(gene_embed_dim) ** 0.25
    logits = (z_emb / scale) @ (q / scale)                           # (B, N)
    attn = jax.nn.softmax(logits, axis=1)[:, :expression_dim]        # (B, x_dim)
    z = jnp.einsum("bn,bne->be", attn, z_emb[:, :expression_dim, :])  # (B, E)
    return z, attn


def _init_params(key, gene_embed_dim=4):
    """Deterministic parameter init (shapes from the module's __init__)."""
    k_w, k_b, k_q = jax.random.split(key, 3)
    fan_in, fan_out = 1, gene_embed_dim
    limit = (6.0 / (fan_in + fan_out)) ** 0.5      # xavier_uniform for Linear weight
    return {
        "gene_embed_w": jax.random.uniform(k_w, (gene_embed_dim, 1),
                                           minval=-limit, maxval=limit,
                                           dtype=jnp.float32),
        "gene_embed_b": jax.random.uniform(k_b, (gene_embed_dim,),
                                           minval=-1.0, maxval=1.0,
                                           dtype=jnp.float32),
        "queryv": jax.random.normal(k_q, (gene_embed_dim,), dtype=jnp.float32),
    }


def _run_case(key, batch, expression_dim, drug_dim, gene_embed_dim,
              max_batch_tile):
    k_p, k_x, k_a, k_b = jax.random.split(key, 4)
    params = _init_params(k_p, gene_embed_dim)
    X = jax.random.normal(k_x, (batch, expression_dim), dtype=jnp.float32)
    h_a = jax.random.normal(k_a, (batch, drug_dim), dtype=jnp.float32)
    h_b = jax.random.normal(k_b, (batch, drug_dim), dtype=jnp.float32)

    z, attn = gene_emb_proj_attention(X, h_a, h_b, params,
                                      gene_embed_dim=gene_embed_dim,
                                      max_batch_tile=max_batch_tile)
    jax.block_until_ready((z, attn))

    z_ref, attn_ref = _reference(X, h_a, h_b, params,
                                 gene_embed_dim=gene_embed_dim)
    assert z.shape == (batch, gene_embed_dim)
    assert attn.shape == (batch, expression_dim)
    assert jnp.allclose(z, z_ref, atol=1e-5, rtol=1e-5)
    assert jnp.allclose(attn, attn_ref, atol=1e-5, rtol=1e-5)


if __name__ == "__main__":
    key = jax.random.PRNGKey(0)
    k1, k2 = jax.random.split(key)

    # module-scale example (batch=2, expression_dim=16, drug dims=8, E=4)
    _run_case(k1, batch=2, expression_dim=16, drug_dim=8, gene_embed_dim=4,
              max_batch_tile=4096)

    # multi-step grid with a ragged last batch block (no wrapper-side padding)
    _run_case(k2, batch=300, expression_dim=16, drug_dim=8, gene_embed_dim=4,
              max_batch_tile=128)

    print("KERNEL_OK")
</pallas_src>

<mosaic_0001>
module attributes {stable_mosaic.version = 11 : i64} {
  func.func @_gene_emb_proj_attn_kernel(%arg0: i32, %arg1: memref<16x2xf32, #tpu.memory_space<vmem>>, %arg2: memref<8x2xf32, #tpu.memory_space<vmem>>, %arg3: memref<8x2xf32, #tpu.memory_space<vmem>>, %arg4: memref<4xf32, #tpu.memory_space<smem>>, %arg5: memref<4xf32, #tpu.memory_space<smem>>, %arg6: memref<4xf32, #tpu.memory_space<smem>>, %arg7: memref<4x2xf32, #tpu.memory_space<vmem>>, %arg8: memref<16x2xf32, #tpu.memory_space<vmem>>) attributes {dimension_semantics = [#tpu.dimension_semantics<parallel>], iteration_bounds = array<i64: 1>, scalar_prefetch = 0 : i64, scratch_operands = 0 : i64, tpu.core_type = #tpu.core_type<tc>, window_params = [{transform_indices = @transform_0, window_bounds = array<i64: 16, 2>}, {transform_indices = @transform_1, window_bounds = array<i64: 8, 2>}, {transform_indices = @transform_2, window_bounds = array<i64: 8, 2>}, {transform_indices = @transform_3, window_bounds = array<i64: 4>}, {transform_indices = @transform_4, window_bounds = array<i64: 4>}, {transform_indices = @transform_5, window_bounds = array<i64: 4>}, {transform_indices = @transform_6, window_bounds = array<i64: 4, 2>}, {transform_indices = @transform_7, window_bounds = array<i64: 16, 2>}]} {
    %c0 = arith.constant 0 : index
    %c0_0 = arith.constant 0 : index
    %0 = vector.load %arg1[%c0, %c0_0] : memref<16x2xf32, #tpu.memory_space<vmem>>, vector<16x2xf32>
    %c0_1 = arith.constant 0 : index
    %c0_2 = arith.constant 0 : index
    %1 = vector.load %arg2[%c0_1, %c0_2] : memref<8x2xf32, #tpu.memory_space<vmem>>, vector<8x2xf32>
    %c0_3 = arith.constant 0 : index
    %c0_4 = arith.constant 0 : index
    %2 = vector.load %arg3[%c0_3, %c0_4] : memref<8x2xf32, #tpu.memory_space<vmem>>, vector<8x2xf32>
    %3 = tpu.concatenate %0, %1, %2 in 0 : vector<16x2xf32>, vector<8x2xf32>, vector<8x2xf32> -> vector<32x2xf32>
    %c0_5 = arith.constant 0 : index
    %4 = memref.load %arg4[%c0_5] : memref<4xf32, #tpu.memory_space<smem>>
    %c0_6 = arith.constant 0 : index
    %5 = memref.load %arg5[%c0_6] : memref<4xf32, #tpu.memory_space<smem>>
    %c0_7 = arith.constant 0 : index
    %6 = memref.load %arg6[%c0_7] : memref<4xf32, #tpu.memory_space<smem>>
    %cst = arith.constant 5.000000e-01 : f32
    %7 = arith.mulf %6, %cst : f32
    %8 = vector.broadcast %4 : f32 to vector<32x2xf32>
    %9 = arith.mulf %3, %8 : vector<32x2xf32>
    %10 = vector.broadcast %5 : f32 to vector<32x2xf32>
    %11 = arith.addf %9, %10 : vector<32x2xf32>
    %cst_8 = arith.constant 0.000000e+00 : f32
    %12 = vector.broadcast %cst_8 : f32 to vector<32x2xf32>
    %13 = arith.maximumf %11, %12 : vector<32x2xf32>
    %14 = vector.extract_strided_slice %13 {offsets = [0, 0], sizes = [16, 2], strides = [1, 1]} : vector<32x2xf32> to vector<16x2xf32>
    %15 = vector.broadcast %7 : f32 to vector<32x2xf32>
    %16 = arith.mulf %13, %15 : vector<32x2xf32>
    %c1 = arith.constant 1 : index
    %17 = memref.load %arg4[%c1] : memref<4xf32, #tpu.memory_space<smem>>
    %c1_9 = arith.constant 1 : index
    %18 = memref.load %arg5[%c1_9] : memref<4xf32, #tpu.memory_space<smem>>
    %c1_10 = arith.constant 1 : index
    %19 = memref.load %arg6[%c1_10] : memref<4xf32, #tpu.memory_space<smem>>
    %cst_11 = arith.constant 5.000000e-01 : f32
    %20 = arith.mulf %19, %cst_11 : f32
    %21 = vector.broadcast %17 : f32 to vector<32x2xf32>
    %22 = arith.mulf %3, %21 : vector<32x2xf32>
    %23 = vector.broadcast %18 : f32 to vector<32x2xf32>
    %24 = arith.addf %22, %23 : vector<32x2xf32>
    %cst_12 = arith.constant 0.000000e+00 : f32
    %25 = vector.broadcast %cst_12 : f32 to vector<32x2xf32>
    %26 = arith.maximumf %24, %25 : vector<32x2xf32>
    %27 = vector.extract_strided_slice %26 {offsets = [0, 0], sizes = [16, 2], strides = [1, 1]} : vector<32x2xf32> to vector<16x2xf32>
    %28 = vector.broadcast %20 : f32 to vector<32x2xf32>
    %29 = arith.mulf %26, %28 : vector<32x2xf32>
    %30 = arith.addf %16, %29 : vector<32x2xf32>
    %c2 = arith.constant 2 : index
    %31 = memref.load %arg4[%c2] : memref<4xf32, #tpu.memory_space<smem>>
    %c2_13 = arith.constant 2 : index
    %32 = memref.load %arg5[%c2_13] : memref<4xf32, #tpu.memory_space<smem>>
    %c2_14 = arith.constant 2 : index
    %33 = memref.load %arg6[%c2_14] : memref<4xf32, #tpu.memory_space<smem>>
    %cst_15 = arith.constant 5.000000e-01 : f32
    %34 = arith.mulf %33, %cst_15 : f32
    %35 = vector.broadcast %31 : f32 to vector<32x2xf32>
    %36 = arith.mulf %3, %35 : vector<32x2xf32>
    %37 = vector.broadcast %32 : f32 to vector<32x2xf32>
    %38 = arith.addf %36, %37 : vector<32x2xf32>
    %cst_16 = arith.constant 0.000000e+00 : f32
    %39 = vector.broadcast %cst_16 : f32 to vector<32x2xf32>
    %40 = arith.maximumf %38, %39 : vector<32x2xf32>
    %41 = vector.extract_strided_slice %40 {offsets = [0, 0], sizes = [16, 2], strides = [1, 1]} : vector<32x2xf32> to vector<16x2xf32>
    %42 = vector.broadcast %34 : f32 to vector<32x2xf32>
    %43 = arith.mulf %40, %42 : vector<32x2xf32>
    %44 = arith.addf %30, %43 : vector<32x2xf32>
    %c3 = arith.constant 3 : index
    %45 = memref.load %arg4[%c3] : memref<4xf32, #tpu.memory_space<smem>>
    %c3_17 = arith.constant 3 : index
    %46 = memref.load %arg5[%c3_17] : memref<4xf32, #tpu.memory_space<smem>>
    %c3_18 = arith.constant 3 : index
    %47 = memref.load %arg6[%c3_18] : memref<4xf32, #tpu.memory_space<smem>>
    %cst_19 = arith.constant 5.000000e-01 : f32
    %48 = arith.mulf %47, %cst_19 : f32
    %49 = vector.broadcast %45 : f32 to vector<32x2xf32>
    %50 = arith.mulf %3, %49 : vector<32x2xf32>
    %51 = vector.broadcast %46 : f32 to vector<32x2xf32>
    %52 = arith.addf %50, %51 : vector<32x2xf32>
    %cst_20 = arith.constant 0.000000e+00 : f32
    %53 = vector.broadcast %cst_20 : f32 to vector<32x2xf32>
    %54 = arith.maximumf %52, %53 : vector<32x2xf32>
    %55 = vector.extract_strided_slice %54 {offsets = [0, 0], sizes = [16, 2], strides = [1, 1]} : vector<32x2xf32> to vector<16x2xf32>
    %56 = vector.broadcast %48 : f32 to vector<32x2xf32>
    %57 = arith.mulf %54, %56 : vector<32x2xf32>
    %58 = arith.addf %44, %57 : vector<32x2xf32>
    %cst_21 = arith.constant dense<0xFF800000> : vector<2xf32>
    %59 = vector.multi_reduction <maximumf>, %58, %cst_21 [0] : vector<32x2xf32> to vector<2xf32>
    %60 = vector.shape_cast %59 : vector<2xf32> to vector<1x2xf32>
    %61 = vector.broadcast %60 : vector<1x2xf32> to vector<32x2xf32>
    %62 = arith.subf %58, %61 : vector<32x2xf32>
    %63 = math.exp %62 : vector<32x2xf32>
    %cst_22 = arith.constant dense<0.000000e+00> : vector<2xf32>
    %64 = vector.multi_reduction <add>, %63, %cst_22 [0] : vector<32x2xf32> to vector<2xf32>
    %65 = vector.shape_cast %64 : vector<2xf32> to vector<1x2xf32>
    %66 = tpu.reciprocal %65 : vector<1x2xf32> -> vector<1x2xf32>
    %67 = vector.extract_strided_slice %63 {offsets = [0, 0], sizes = [16, 2], strides = [1, 1]} : vector<32x2xf32> to vector<16x2xf32>
    %68 = vector.broadcast %66 : vector<1x2xf32> to vector<16x2xf32>
    %69 = arith.mulf %67, %68 : vector<16x2xf32>
    %c0_23 = arith.constant 0 : index
    %c0_24 = arith.constant 0 : index
    %70 = vector.load %arg8[%c0_23, %c0_24] : memref<16x2xf32, #tpu.memory_space<vmem>>, vector<16x2xf32>
    tpu.vector_store %arg8[%c0_23, %c0_24], %69 {strides = array<i32>} : memref<16x2xf32, #tpu.memory_space<vmem>>, vector<16x2xf32>,
    %71 = arith.mulf %69, %14 : vector<16x2xf32>
    %cst_25 = arith.constant dense<0.000000e+00> : vector<2xf32>
    %72 = vector.multi_reduction <add>, %71, %cst_25 [0] : vector<16x2xf32> to vector<2xf32>
    %73 = vector.shape_cast %72 : vector<2xf32> to vector<1x2xf32>
    %c0_26 = arith.constant 0 : index
    %c0_27 = arith.constant 0 : index
    %74 = vector.load %arg7[%c0_26, %c0_27] : memref<4x2xf32, #tpu.memory_space<vmem>>, vector<1x2xf32>
    tpu.vector_store %arg7[%c0_26, %c0_27], %73 {strides = array<i32>} : memref<4x2xf32, #tpu.memory_space<vmem>>, vector<1x2xf32>,
    %75 = arith.mulf %69, %27 : vector<16x2xf32>
    %cst_28 = arith.constant dense<0.000000e+00> : vector<2xf32>
    %76 = vector.multi_reduction <add>, %75, %cst_28 [0] : vector<16x2xf32> to vector<2xf32>
    %77 = vector.shape_cast %76 : vector<2xf32> to vector<1x2xf32>
    %c1_29 = arith.constant 1 : index
    %c0_30 = arith.constant 0 : index
    %78 = vector.load %arg7[%c1_29, %c0_30] : memref<4x2xf32, #tpu.memory_space<vmem>>, vector<1x2xf32>
    tpu.vector_store %arg7[%c1_29, %c0_30], %77 {strides = array<i32>} : memref<4x2xf32, #tpu.memory_space<vmem>>, vector<1x2xf32>,
    %79 = arith.mulf %69, %41 : vector<16x2xf32>
    %cst_31 = arith.constant dense<0.000000e+00> : vector<2xf32>
    %80 = vector.multi_reduction <add>, %79, %cst_31 [0] : vector<16x2xf32> to vector<2xf32>
    %81 = vector.shape_cast %80 : vector<2xf32> to vector<1x2xf32>
    %c2_32 = arith.constant 2 : index
    %c0_33 = arith.constant 0 : index
    %82 = vector.load %arg7[%c2_32, %c0_33] : memref<4x2xf32, #tpu.memory_space<vmem>>, vector<1x2xf32>
    tpu.vector_store %arg7[%c2_32, %c0_33], %81 {strides = array<i32>} : memref<4x2xf32, #tpu.memory_space<vmem>>, vector<1x2xf32>,
    %83 = arith.mulf %69, %55 : vector<16x2xf32>
    %cst_34 = arith.constant dense<0.000000e+00> : vector<2xf32>
    %84 = vector.multi_reduction <add>, %83, %cst_34 [0] : vector<16x2xf32> to vector<2xf32>
    %85 = vector.shape_cast %84 : vector<2xf32> to vector<1x2xf32>
    %c3_35 = arith.constant 3 : index
    %c0_36 = arith.constant 0 : index
    %86 = vector.load %arg7[%c3_35, %c0_36] : memref<4x2xf32, #tpu.memory_space<vmem>>, vector<1x2xf32>
    tpu.vector_store %arg7[%c3_35, %c0_36], %85 {strides = array<i32>} : memref<4x2xf32, #tpu.memory_space<vmem>>, vector<1x2xf32>,
    return
  }
  func.func @transform_0(%arg0: i32) -> (i32, i32) {
    %c0_i32 = arith.constant 0 : i32
    %c0_i32_0 = arith.constant 0 : i32
    return %c0_i32, %arg0 : i32, i32
  }
  func.func @transform_1(%arg0: i32) -> (i32, i32) {
    %c0_i32 = arith.constant 0 : i32
    %c0_i32_0 = arith.constant 0 : i32
    return %c0_i32, %arg0 : i32, i32
  }
  func.func @transform_2(%arg0: i32) -> (i32, i32) {
    %c0_i32 = arith.constant 0 : i32
    %c0_i32_0 = arith.constant 0 : i32
    return %c0_i32, %arg0 : i32, i32
  }
  func.func @transform_3(%arg0: i32) -> i32 {
    %c0_i32 = arith.constant 0 : i32
    %c0_i32_0 = arith.constant 0 : i32
    return %c0_i32 : i32
  }
  func.func @transform_4(%arg0: i32) -> i32 {
    %c0_i32 = arith.constant 0 : i32
    %c0_i32_0 = arith.constant 0 : i32
    return %c0_i32 : i32
  }
  func.func @transform_5(%arg0: i32) -> i32 {
    %c0_i32 = arith.constant 0 : i32
    %c0_i32_0 = arith.constant 0 : i32
    return %c0_i32 : i32
  }
  func.func @transform_6(%arg0: i32) -> (i32, i32) {
    %c0_i32 = arith.constant 0 : i32
    %c0_i32_0 = arith.constant 0 : i32
    return %c0_i32, %arg0 : i32, i32
  }
  func.func @transform_7(%arg0: i32) -> (i32, i32) {
    %c0_i32 = arith.constant 0 : i32
    %c0_i32_0 = arith.constant 0 : i32
    return %c0_i32, %arg0 : i32, i32
  }
}

</mosaic_0001>

<llo_original>
// kernel: tpu_custom_call.1
$region0: #{tpu_custom_call.1}
  #allocation0 [shape = 'u32[]', space=smem, size = 0x4, offset = 0x4, fixed_abs, tag = 'smem constant byte address 0x4 - core index']
  #allocation1 [shape = 'u32[144,128]{1,0:T(1,128)}', space=vmem, size = 0x12000, scoped, tag = 'internal scratch']
  %s0 = inlined_call_operand.vmem [shape: f32[16,2], index: 0, kind: input, shape index: {}]
  %s1 = inlined_call_operand.vmem [shape: f32[8,2], index: 1, kind: input, shape index: {}]
  %s2 = inlined_call_operand.vmem [shape: f32[8,2], index: 2, kind: input, shape index: {}]
  %s3 = inlined_call_operand.vmem [shape: f32[4], index: 3, kind: input, shape index: {}]
  %s4 = inlined_call_operand.vmem [shape: f32[4], index: 4, kind: input, shape index: {}]
  %s5 = inlined_call_operand.vmem [shape: f32[4], index: 5, kind: input, shape index: {}]
  %s6 = inlined_call_operand.vmem [shape: f32[4,2], index: 6, kind: output, shape index: {0}]
  %s7 = inlined_call_operand.vmem [shape: f32[16,2], index: 7, kind: output, shape index: {1}]
  %8 = xla_tuple %s6, %s7
  %s9 = sld [smem:[#allocation0]]
  $region54: #{tpu_custom_call.1} parent=0
    _
  %s11 = ssub.s32 1, %s9
  %s12 = scalar_select 0, %s11, %s9
  $region1: #{tpu_custom_call.1} parent=0
    #allocation2 [shape = 'u8[512]{0}', space=smem, size = 0x200, scoped, tag = 'input window, operand 3, single buffered']
    #allocation3 [shape = 's32[1]{0}', space=sflag, size = 0x4, scoped, tag = 'scoped memory for tpu_custom_call.1']
    #allocation4 [shape = 'u8[512]{0}', space=smem, size = 0x200, scoped, tag = 'input window, operand 4, single buffered']
    #allocation5 [shape = 's32[1]{0}', space=sflag, size = 0x4, scoped, tag = 'scoped memory for tpu_custom_call.1']
    #allocation6 [shape = 'u8[512]{0}', space=smem, size = 0x200, scoped, tag = 'input window, operand 5, single buffered']
    %13 = vsyncpa [#allocation3], 0
    %14 = vsyncpa [#allocation5], 0
    // Predicated region
    $region2: #{tpu_custom_call.1} parent=1 // pred_check
      _
    $region3: #{tpu_custom_call.1} parent=1 // pred_check_branch
      %16 = sbr.rel (0) target = $region5
    $region4: #{tpu_custom_call.1} parent=1 // pred_region
      _
    $region5: #{tpu_custom_call.1} parent=1 // pred_fallthru
      _
    // Predicated region
    $region6: #{tpu_custom_call.1} parent=1 // pred_check
      _
    $region7: #{tpu_custom_call.1} parent=1 // pred_check_branch
      %18 = sbr.rel (0) target = $region9
    $region8: #{tpu_custom_call.1} parent=1 // pred_region
      _
    $region9: #{tpu_custom_call.1} parent=1 // pred_fallthru
      _
    // Predicated region
    $region10: #{tpu_custom_call.1} parent=1 // pred_check
      _
    $region11: #{tpu_custom_call.1} parent=1 // pred_check_branch
      %20 = sbr.rel (0) target = $region13
    $region12: #{tpu_custom_call.1} parent=1 // pred_region
      _
    $region13: #{tpu_custom_call.1} parent=1 // pred_fallthru
      _
    // Predicated region
    $region14: #{tpu_custom_call.1} parent=1 // pred_check
      _
    $region15: #{tpu_custom_call.1} parent=1 // pred_check_branch
      %22 = sbr.rel (0) target = $region17
    $region16: #{tpu_custom_call.1} parent=1 // pred_region
      %s24 = ssub.s32 16, 16
      %25 = vsyncadd [#allocation3], %s24
      %s27 = sshll.u32 %s3, 4
      %s28 = int_to_ptr.vmem [resolvable:$true] %s27
      %30 = dma.vmem_to_smem %s28, 16, [#allocation2], [#allocation3]
    $region17: #{tpu_custom_call.1} parent=1 // pred_fallthru
      _
    // Predicated region
    $region18: #{tpu_custom_call.1} parent=1 // pred_check
      _
    $region19: #{tpu_custom_call.1} parent=1 // pred_check_branch
      %32 = sbr.rel (0) target = $region21
    $region20: #{tpu_custom_call.1} parent=1 // pred_region
      %s34 = ssub.s32 16, 16
      %35 = vsyncadd [#allocation5], %s34
      %s37 = sshll.u32 %s4, 4
      %s38 = int_to_ptr.vmem [resolvable:$true] %s37
      %40 = dma.vmem_to_smem %s38, 16, [#allocation4], [#allocation5]
    $region21: #{tpu_custom_call.1} parent=1 // pred_fallthru
      _
    // Predicated region
    $region22: #{tpu_custom_call.1} parent=1 // pred_check
      _
    $region23: #{tpu_custom_call.1} parent=1 // pred_check_branch
      %42 = sbr.rel (0) target = $region25
    $region24: #{tpu_custom_call.1} parent=1 // pred_region
      %s44 = ssub.s32 16, 16
      %45 = vsyncadd [#allocation5], %s44
      %s47 = sshll.u32 %s5, 4
      %s48 = int_to_ptr.vmem [resolvable:$true] %s47
      %50 = dma.vmem_to_smem %s48, 16, [#allocation6], [#allocation5]
    $region25: #{tpu_custom_call.1} parent=1 // pred_fallthru
      _
    // Predicated region
    $region26: #{tpu_custom_call.1} parent=1 // pred_check
      _
    $region27: #{tpu_custom_call.1} parent=1 // pred_check_branch
      %52 = sbr.rel (0) target = $region29
    $region28: #{tpu_custom_call.1} parent=1 // pred_region
      %53 = dma.done [#allocation3], 16
    $region29: #{tpu_custom_call.1} parent=1 // pred_fallthru
      _
    // Predicated region
    $region30: #{tpu_custom_call.1} parent=1 // pred_check
      _
    $region31: #{tpu_custom_call.1} parent=1 // pred_check_branch
      %55 = sbr.rel (0) target = $region33
    $region32: #{tpu_custom_call.1} parent=1 // pred_region
      %56 = dma.done [#allocation5], 16
    $region33: #{tpu_custom_call.1} parent=1 // pred_fallthru
      _
    // Predicated region
    $region34: #{tpu_custom_call.1} parent=1 // pred_check
      _
    $region35: #{tpu_custom_call.1} parent=1 // pred_check_branch
      %58 = sbr.rel (0) target = $region37
    $region36: #{tpu_custom_call.1} parent=1 // pred_region
      %59 = dma.done [#allocation5], 16
    $region37: #{tpu_custom_call.1} parent=1 // pred_fallthru
      _
    %60 = sfence
    %v61 = vld [vmem:[%s0] sm:$0xff]
    %v62 = vld [vmem:[%s0 + $0x8] sm:$0xff]
    %v63 = vld [vmem:[%s1] sm:$0xff]
    %v64 = vld [vmem:[%s2] sm:$0xff]
    %s65 = sld [smem:[#allocation2]]
    %s66 = sld [smem:[#allocation4]]
    %s67 = sld [smem:[#allocation6]]
    %s68 = smul.f32 %s67, 0.5
    %v69 = vstv %s65
    %v70 = vmul.f32 %v61, %v69
    %v71 = vmul.f32 %v62, %v69
    %v72 = vmul.f32 %v63, %v69
    %v73 = vmul.f32 %v64, %v69
    %v74 = vstv %s66
    %v75 = vadd.f32 %v70, %v74
    %v76 = vadd.f32 %v71, %v74
    %v77 = vadd.f32 %v72, %v74
    %v78 = vadd.f32 %v73, %v74
    %v79 = vmax.f32 %v75, 0.0
    %v80 = vmax.f32 %v76, 0.0
    %v81 = vmax.f32 %v77, 0.0
    %v82 = vmax.f32 %v78, 0.0
    %v83 = vstv %s68
    %v84 = vmul.f32 %v79, %v83
    %v85 = vmul.f32 %v80, %v83
    %v86 = vmul.f32 %v81, %v83
    %v87 = vmul.f32 %v82, %v83
    %s88 = sld [smem:[#allocation2 + $0x1]]
    %s89 = sld [smem:[#allocation4 + $0x1]]
    %s90 = sld [smem:[#allocation6 + $0x1]]
    %s91 = smul.f32 %s90, 0.5
    %v92 = vstv %s88
    %v93 = vmul.f32 %v61, %v92
    %v94 = vmul.f32 %v62, %v92
    %v95 = vmul.f32 %v63, %v92
    %v96 = vmul.f32 %v64, %v92
    %v97 = vstv %s89
    %v98 = vadd.f32 %v93, %v97
    %v99 = vadd.f32 %v94, %v97
    %v100 = vadd.f32 %v95, %v97
    %v101 = vadd.f32 %v96, %v97
    %v102 = vmax.f32 %v98, 0.0
    %v103 = vmax.f32 %v99, 0.0
    %v104 = vmax.f32 %v100, 0.0
    %v105 = vmax.f32 %v101, 0.0
    %v106 = vstv %s91
    %v107 = vmul.f32 %v102, %v106
    %v108 = vmul.f32 %v103, %v106
    %v109 = vmul.f32 %v104, %v106
    %v110 = vmul.f32 %v105, %v106
    %v111 = vadd.f32 %v84, %v107
    %v112 = vadd.f32 %v85, %v108
    %v113 = vadd.f32 %v86, %v109
    %v114 = vadd.f32 %v87, %v110
    %s115 = sld [smem:[#allocation2 + $0x2]]
    %s116 = sld [smem:[#allocation4 + $0x2]]
    %s117 = sld [smem:[#allocation6 + $0x2]]
    %s118 = smul.f32 %s117, 0.5
    %v119 = vstv %s115
    %v120 = vmul.f32 %v61, %v119
    %v121 = vmul.f32 %v62, %v119
    %v122 = vmul.f32 %v63, %v119
    %v123 = vmul.f32 %v64, %v119
    %v124 = vstv %s116
    %v125 = vadd.f32 %v120, %v124
    %v126 = vadd.f32 %v121, %v124
    %v127 = vadd.f32 %v122, %v124
    %v128 = vadd.f32 %v123, %v124
    %v129 = vmax.f32 %v125, 0.0
    %v130 = vmax.f32 %v126, 0.0
    %v131 = vmax.f32 %v127, 0.0
    %v132 = vmax.f32 %v128, 0.0
    %v133 = vstv %s118
    %v134 = vmul.f32 %v129, %v133
    %v135 = vmul.f32 %v130, %v133
    %v136 = vmul.f32 %v131, %v133
    %v137 = vmul.f32 %v132, %v133
    %v138 = vadd.f32 %v111, %v134
    %v139 = vadd.f32 %v112, %v135
    %v140 = vadd.f32 %v113, %v136
    %v141 = vadd.f32 %v114, %v137
    %s142 = sld [smem:[#allocation2 + $0x3]]
    %s143 = sld [smem:[#allocation4 + $0x3]]
    %s144 = sld [smem:[#allocation6 + $0x3]]
    %s145 = smul.f32 %s144, 0.5
    %v146 = vstv %s142
    %v147 = vmul.f32 %v61, %v146
    %v148 = vmul.f32 %v62, %v146
    %v149 = vmul.f32 %v63, %v146
    %v150 = vmul.f32 %v64, %v146
    %v151 = vstv %s143
    %v152 = vadd.f32 %v147, %v151
    %v153 = vadd.f32 %v148, %v151
    %v154 = vadd.f32 %v149, %v151
    %v155 = vadd.f32 %v150, %v151
    %v156 = vmax.f32 %v152, 0.0
    %v157 = vmax.f32 %v153, 0.0
    %v158 = vmax.f32 %v154, 0.0
    %v159 = vmax.f32 %v155, 0.0
    %v160 = vstv %s145
    %v161 = vmul.f32 %v156, %v160
    %v162 = vmul.f32 %v157, %v160
    %v163 = vmul.f32 %v158, %v160
    %v164 = vmul.f32 %v159, %v160
    %v165 = vadd.f32 %v138, %v161
    %v166 = vadd.f32 %v139, %v162
    %v167 = vadd.f32 %v140, %v163
    %v168 = vadd.f32 %v141, %v164
    %vm169 = vcmask 15360
    %v170 = vsel %vm169, %v165, -inf
    %v171 = vsel %vm169, %v166, -inf
    %v172 = vsel %vm169, %v167, -inf
    %v173 = vsel %vm169, %v168, -inf
    %v174 = vmax.f32 %v170, %v171
    %v175 = vmax.f32 %v172, %v173
    %v176 = vmax.f32 %v174, %v175
    %v177 = vrot.slane %v176, 4
    %v178 = vmax.f32 %v176, %v177
    %v179 = vrot.slane %v178, 2
    %v180 = vmax.f32 %v178, %v179
    %v181 = vrot.slane %v180, 1
    %v182 = vmax.f32 %v180, %v181
    %v183 = vsub.f32 %v165, %v182
    %v184 = vsub.f32 %v166, %v182
    %v185 = vsub.f32 %v167, %v182
    %v186 = vsub.f32 %v168, %v182
    %v187 = vmul.f32 %v183, 1.442695
    %v188 = vpow.pop %v187
    %v189 = vmul.f32 %v184, 1.442695
    %v190 = vpow.pop %v189
    %v191 = vmul.f32 %v185, 1.442695
    %v192 = vpow.pop %v191
    %v193 = vmul.f32 %v186, 1.442695
    %v194 = vpow.pop %v193
    %v195 = vsel %vm169, %v188, 0.0
    %v196 = vsel %vm169, %v190, 0.0
    %v197 = vadd.f32 %v195, %v196
    %v198 = vsel %vm169, %v192, 0.0
    %v199 = vadd.f32 %v197, %v198
    %v200 = vsel %vm169, %v194, 0.0
    %v201 = vadd.f32 %v199, %v200
    %v202 = vrot.slane %v201, 4
    %v203 = vadd.f32 %v201, %v202
    %v204 = vrot.slane %v203, 2
    %v205 = vadd.f32 %v203, %v204
    %v206 = vrot.slane %v205, 1
    %v207 = vadd.f32 %v205, %v206
    %v208 = vrcp.pop %v207
    %v209 = vmul.f32 %v188, %v208
    %v210 = vmul.f32 %v190, %v208
    %211 = vst.msk [vmem:[%s7] sm:$0xff] %vm169, %v209
    %212 = vst.msk [vmem:[%s7 + $0x8] sm:$0xff] %vm169, %v210
    %v213 = vmul.f32 %v209, %v79
    %v214 = vmul.f32 %v210, %v80
    %v215 = vsel %vm169, %v213, 0.0
    %v216 = vsel %vm169, %v214, 0.0
    %v217 = vadd.f32 %v215, %v216
    %v218 = vrot.slane %v217, 4
    %v219 = vadd.f32 %v217, %v218
    %v220 = vrot.slane %v219, 2
    %v221 = vadd.f32 %v219, %v220
    %v222 = vrot.slane %v221, 1
    %v223 = vadd.f32 %v221, %v222
    %vm224 = vcmask 8192
    %225 = vst.msk [vmem:[%s6] sm:$0x1] %vm224, %v223
    %v226 = vmul.f32 %v209, %v102
    %v227 = vmul.f32 %v210, %v103
    %v228 = vsel %vm169, %v226, 0.0
    %v229 = vsel %vm169, %v227, 0.0
    %v230 = vadd.f32 %v228, %v229
    %v231 = vrot.slane %v230, 4
    %v232 = vadd.f32 %v230, %v231
    %v233 = vrot.slane %v232, 2
    %v234 = vadd.f32 %v232, %v233
    %v235 = vrot.slane %v234, 1
    %v236 = vadd.f32 %v234, %v235
    %237 = vst.msk [vmem:[%s6 + $0x1] sm:$0x1] %vm224, %v236
    %v238 = vmul.f32 %v209, %v129
    %v239 = vmul.f32 %v210, %v130
    %v240 = vsel %vm169, %v238, 0.0
    %v241 = vsel %vm169, %v239, 0.0
    %v242 = vadd.f32 %v240, %v241
    %v243 = vrot.slane %v242, 4
    %v244 = vadd.f32 %v242, %v243
    %v245 = vrot.slane %v244, 2
    %v246 = vadd.f32 %v244, %v245
    %v247 = vrot.slane %v246, 1
    %v248 = vadd.f32 %v246, %v247
    %249 = vst.msk [vmem:[%s6 + $0x2] sm:$0x1] %vm224, %v248
    %v250 = vmul.f32 %v209, %v156
    %v251 = vmul.f32 %v210, %v157
    %v252 = vsel %vm169, %v250, 0.0
    %v253 = vsel %vm169, %v251, 0.0
    %v254 = vadd.f32 %v252, %v253
    %v255 = vrot.slane %v254, 4
    %v256 = vadd.f32 %v254, %v255
    %v257 = vrot.slane %v256, 2
    %v258 = vadd.f32 %v256, %v257
    %v259 = vrot.slane %v258, 1
    %v260 = vadd.f32 %v258, %v259
    %261 = vst.msk [vmem:[%s6 + $0x3] sm:$0x1] %vm224, %v260
    // Predicated region
    $region38: #{tpu_custom_call.1} parent=1 // pred_check
      _
    $region39: #{tpu_custom_call.1} parent=1 // pred_check_branch
      %263 = sbr.rel (0) target = $region41
    $region40: #{tpu_custom_call.1} parent=1 // pred_region
      _
    $region41: #{tpu_custom_call.1} parent=1 // pred_fallthru
      _
    // Predicated region
    $region42: #{tpu_custom_call.1} parent=1 // pred_check
      _
    $region43: #{tpu_custom_call.1} parent=1 // pred_check_branch
      %265 = sbr.rel (0) target = $region45
    $region44: #{tpu_custom_call.1} parent=1 // pred_region
      _
    $region45: #{tpu_custom_call.1} parent=1 // pred_fallthru
      _
    // Predicated region
    $region46: #{tpu_custom_call.1} parent=1 // pred_check
      _
    $region47: #{tpu_custom_call.1} parent=1 // pred_check_branch
      %267 = sbr.rel (0) target = $region49
    $region48: #{tpu_custom_call.1} parent=1 // pred_region
      _
    $region49: #{tpu_custom_call.1} parent=1 // pred_fallthru
      _
    // Predicated region
    $region50: #{tpu_custom_call.1} parent=1 // pred_check
      _
    $region51: #{tpu_custom_call.1} parent=1 // pred_check_branch
      %269 = sbr.rel (0) target = $region53
    $region52: #{tpu_custom_call.1} parent=1 // pred_region
      _
    $region53: #{tpu_custom_call.1} parent=1 // pred_fallthru
      _
    %270 = vsyncpa [#allocation3], 1
    %271 = vsyncpa [#allocation5], 1

</llo_original>
